<compile_context>
chip_gen: v5e
topology: v5e:2x2
jax: 0.10.0
libtpu: 0.0.40
codegen_flags: <defaults>
</compile_context>

<pallas_src>
import jax
import jax.numpy as jnp
from jax.experimental import pallas as pl
from jax.experimental.pallas import tpu as pltpu

_ALIGN = 16        # bf16 sublane packing; also a multiple of the f32 sublane (8)
_MAX_TILE = 2048   # VMEM working set at 2048 rows is still < 1 MiB


def _round_up(x, m):
    return ((x + m - 1) // m) * m


def _mlp_kernel(x_ref, w1_ref, b1_ref, w2_ref, b2_ref, w3_ref, b3_ref, o_ref):
    """Fused 3-layer MLP on one batch tile.

    x_ref  : (tile, D)   VMEM  (bf16 by default)
    w1_ref : (D, H1)     VMEM  (bf16 by default)
    b1_ref : (1, H1)     VMEM  f32
    w2_ref : (H1, H2)    VMEM  (bf16 by default)
    b2_ref : (1, H2)     VMEM  f32
    w3_ref : (H2, 1)     VMEM  f32
    b3_ref : (1, 1)      SMEM  f32 scalar
    o_ref  : (tile, 1)   VMEM  f32
    """
    # Layer 1: MXU matmul with f32 accumulation; bias + ReLU on the VPU in f32.
    h1 = jnp.dot(x_ref[...], w1_ref[...], preferred_element_type=jnp.float32)
    h1 = jnp.maximum(h1 + b1_ref[...], 0.0)
    # Layer 2: cast the activation back to the matmul dtype for the MXU.
    h2 = jnp.dot(h1.astype(w2_ref.dtype), w2_ref[...],
                 preferred_element_type=jnp.float32)
    h2 = jnp.maximum(h2 + b2_ref[...], 0.0)
    # Value head: tiny (tile, H2) @ (H2, 1) in f32, standard orientation
    # (avoids an XLU transpose of h2); identity output activation.
    v = jnp.dot(h2, w3_ref[...], preferred_element_type=jnp.float32) + b3_ref[0, 0]
    o_ref[...] = v.astype(o_ref.dtype)


def _select_tile(batch, batch_tile):
    cap = _round_up(min(max(int(batch_tile), _ALIGN), _MAX_TILE), _ALIGN)
    if batch <= 2 * cap:
        # Aim for (at least) 2 grid steps so the "parallel" batch axis can be
        # split across both TensorCores on v7x; tiny batches shrink the tile.
        return min(cap, _round_up(max((batch + 1) // 2, 1), _ALIGN))
    return cap


def value_network_forward(state, params, *, batch_tile=1024,
                          matmul_dtype=jnp.bfloat16):
    """ValueNetwork forward pass via a single fused pallas_call.

    state:  (B, num_inputs) float32
    params: dict with w1 (D,H1), b1 (1,H1), w2 (H1,H2), b2 (1,H2),
            w3 (H2,1), b3 (1,1) — all float32.
    matmul_dtype: dtype of the MXU operands for the two hidden-layer matmuls
            (accumulation is always float32).
    returns (B, 1) float32
    """
    B, D = state.shape
    H1 = params["w1"].shape[1]
    H2 = params["w2"].shape[1]

    tile = _select_tile(B, batch_tile)
    num_tiles = -(-B // tile)
    B_pad = num_tiles * tile

    x = state.astype(matmul_dtype)
    if B_pad != B:
        x = jnp.pad(x, ((0, B_pad - B), (0, 0)))   # padded rows sliced off below
    w1 = params["w1"].astype(matmul_dtype)
    w2 = params["w2"].astype(matmul_dtype)

    itemsize = jnp.dtype(matmul_dtype).itemsize
    flops = 2 * B_pad * (D * H1 + H1 * H2 + H2)
    bytes_accessed = int(itemsize * (B_pad * D + D * H1 + H1 * H2)
                         + 4 * (B_pad + H1 + H2 + H2 + 1))

    rep = lambda i: (0, 0)   # weights/biases: whole-array block, VMEM-resident

    out = pl.pallas_call(
        _mlp_kernel,
        out_shape=jax.ShapeDtypeStruct((B_pad, 1), jnp.float32),
        grid_spec=pltpu.PrefetchScalarGridSpec(
            num_scalar_prefetch=0,
            grid=(num_tiles,),
            in_specs=[
                pl.BlockSpec((tile, D), lambda i: (i, 0)),           # x tile
                pl.BlockSpec((D, H1), rep),                          # W1
                pl.BlockSpec((1, H1), rep),                          # b1
                pl.BlockSpec((H1, H2), rep),                         # W2
                pl.BlockSpec((1, H2), rep),                          # b2
                pl.BlockSpec((H2, 1), rep),                          # W3
                pl.BlockSpec(memory_space=pltpu.MemorySpace.SMEM),   # b3 scalar
            ],
            out_specs=pl.BlockSpec((tile, 1), lambda i: (i, 0)),
        ),
        compiler_params=pltpu.CompilerParams(
            dimension_semantics=("parallel",),
        ),
        cost_estimate=pl.CostEstimate(
            flops=flops, transcendentals=0, bytes_accessed=bytes_accessed),
    )(
        x, w1, params["b1"], w2, params["b2"], params["w3"], params["b3"],
    )

    return out[:B]   # (B, 1); no relayout needed — output is already (B_pad, 1)


def xavier_uniform(key, shape):
    """xavier_uniform_ with gain=1 over a (fan_in, fan_out) matrix."""
    fan_in, fan_out = shape
    limit = jnp.sqrt(6.0 / (fan_in + fan_out))
    return jax.random.uniform(key, shape, jnp.float32, -limit, limit)


def init_value_network(key, num_inputs, hidden_sizes):
    """Mirrors weights_init_: xavier_uniform weights, zero bias."""
    h1, h2 = hidden_sizes
    k1, k2, k3 = jax.random.split(key, 3)
    return {
        "w1": xavier_uniform(k1, (num_inputs, h1)),
        "b1": jnp.zeros((1, h1), jnp.float32),
        "w2": xavier_uniform(k2, (h1, h2)),
        "b2": jnp.zeros((1, h2), jnp.float32),
        "w3": xavier_uniform(k3, (h2, 1)),
        "b3": jnp.zeros((1, 1), jnp.float32),
    }


def value_network_ref(state, params, matmul_dtype=jnp.float32):
    """Pure-JAX reference. matmul_dtype mirrors the kernel's MXU input dtype."""
    c = lambda a: a.astype(matmul_dtype)
    h1 = jnp.maximum(
        jnp.dot(c(state), c(params["w1"]), preferred_element_type=jnp.float32)
        + params["b1"], 0.0)
    h2 = jnp.maximum(
        jnp.dot(c(h1), c(params["w2"]), preferred_element_type=jnp.float32)
        + params["b2"], 0.0)
    return jnp.dot(h2, params["w3"],
                   preferred_element_type=jnp.float32) + params["b3"]


if __name__ == "__main__":
    key = jax.random.PRNGKey(0)
    k_params, k_state = jax.random.split(key)

    num_inputs = 32
    hidden_sizes = (64, 64)

    params = init_value_network(k_params, num_inputs, hidden_sizes)

    # 1) Ragged small batch: exercises tile shrink (16 rows), padding, and the
    #    >=2-grid-step path.
    batch = 20
    state = jax.random.normal(k_state, (batch, num_inputs), jnp.float32)

    # f32 mode: bit-faithful to the PyTorch module.
    out_f32 = jax.block_until_ready(
        value_network_forward(state, params, matmul_dtype=jnp.float32))
    ref_f32 = value_network_ref(state, params)
    assert out_f32.shape == (batch, 1), out_f32.shape
    assert jnp.allclose(out_f32, ref_f32, atol=1e-5, rtol=1e-5), \
        "f32 kernel mismatch vs reference"

    # Default bf16-MXU mode: tight vs a bf16-quantized reference, loose vs f32.
    out_bf16 = jax.block_until_ready(value_network_forward(state, params))
    ref_bf16 = value_network_ref(state, params, matmul_dtype=jnp.bfloat16)
    assert jnp.allclose(out_bf16, ref_bf16, atol=1e-4, rtol=1e-4), \
        "bf16 kernel mismatch vs bf16-quantized reference"
    assert jnp.allclose(out_bf16, ref_f32, atol=5e-2, rtol=5e-2), \
        "bf16 kernel drifted too far from the f32 reference"

    # 2) Larger batch: multi-tile path (2 grid steps of 256 rows with defaults).
    state2 = jax.random.normal(jax.random.PRNGKey(1), (512, num_inputs),
                               jnp.float32)
    out2 = jax.block_until_ready(value_network_forward(state2, params))
    ref2 = value_network_ref(state2, params, matmul_dtype=jnp.bfloat16)
    assert out2.shape == (512, 1), out2.shape
    assert jnp.allclose(out2, ref2, atol=1e-4, rtol=1e-4), \
        "bf16 kernel mismatch vs reference (multi-tile)"

    print("KERNEL_OK")
</pallas_src>

<mosaic_0001>
module attributes {stable_mosaic.version = 11 : i64} {
  func.func @_mlp_kernel(%arg0: i32, %arg1: memref<16x32xf32, #tpu.memory_space<vmem>>, %arg2: memref<32x64xf32, #tpu.memory_space<vmem>>, %arg3: memref<1x64xf32, #tpu.memory_space<vmem>>, %arg4: memref<64x64xf32, #tpu.memory_space<vmem>>, %arg5: memref<1x64xf32, #tpu.memory_space<vmem>>, %arg6: memref<64x1xf32, #tpu.memory_space<vmem>>, %arg7: memref<1x1xf32, #tpu.memory_space<smem>>, %arg8: memref<16x1xf32, #tpu.memory_space<vmem>>) attributes {dimension_semantics = [#tpu.dimension_semantics<parallel>], iteration_bounds = array<i64: 2>, scalar_prefetch = 0 : i64, scratch_operands = 0 : i64, tpu.core_type = #tpu.core_type<tc>, window_params = [{transform_indices = @transform_0, window_bounds = array<i64: 16, 32>}, {pipeline_mode = #tpu.pipeline_mode<synchronous>, transform_indices = @transform_1, window_bounds = array<i64: 32, 64>}, {pipeline_mode = #tpu.pipeline_mode<synchronous>, transform_indices = @transform_2, window_bounds = array<i64: 1, 64>}, {pipeline_mode = #tpu.pipeline_mode<synchronous>, transform_indices = @transform_3, window_bounds = array<i64: 64, 64>}, {pipeline_mode = #tpu.pipeline_mode<synchronous>, transform_indices = @transform_4, window_bounds = array<i64: 1, 64>}, {pipeline_mode = #tpu.pipeline_mode<synchronous>, transform_indices = @transform_5, window_bounds = array<i64: 64, 1>}, {transform_indices = @transform_6, window_bounds = array<i64: 1, 1>}, {transform_indices = @transform_7, window_bounds = array<i64: 16, 1>}]} {
    %c0 = arith.constant 0 : index
    %c0_0 = arith.constant 0 : index
    %0 = vector.load %arg1[%c0, %c0_0] : memref<16x32xf32, #tpu.memory_space<vmem>>, vector<16x32xf32>
    %c0_1 = arith.constant 0 : index
    %c0_2 = arith.constant 0 : index
    %1 = vector.load %arg2[%c0_1, %c0_2] : memref<32x64xf32, #tpu.memory_space<vmem>>, vector<32x64xf32>
    %cst = arith.constant dense<0.000000e+00> : vector<16x64xf32>
    %2 = tpu.matmul %0, %1, %cst {dimension_numbers = #tpu.dot_dimension_numbers<[1], [0], [0], [1], [0, 0, 1, 1], [], []>} : vector<16x32xf32>, vector<32x64xf32>, vector<16x64xf32> -> vector<16x64xf32>
    %c0_3 = arith.constant 0 : index
    %c0_4 = arith.constant 0 : index
    %3 = vector.load %arg3[%c0_3, %c0_4] : memref<1x64xf32, #tpu.memory_space<vmem>>, vector<1x64xf32>
    %4 = vector.broadcast %3 : vector<1x64xf32> to vector<16x64xf32>
    %5 = arith.addf %2, %4 : vector<16x64xf32>
    %cst_5 = arith.constant 0.000000e+00 : f32
    %6 = vector.broadcast %cst_5 : f32 to vector<16x64xf32>
    %7 = arith.maximumf %5, %6 : vector<16x64xf32>
    %c0_6 = arith.constant 0 : index
    %c0_7 = arith.constant 0 : index
    %8 = vector.load %arg4[%c0_6, %c0_7] : memref<64x64xf32, #tpu.memory_space<vmem>>, vector<64x64xf32>
    %cst_8 = arith.constant dense<0.000000e+00> : vector<16x64xf32>
    %9 = tpu.matmul %7, %8, %cst_8 {dimension_numbers = #tpu.dot_dimension_numbers<[1], [0], [0], [1], [0, 0, 1, 1], [], []>} : vector<16x64xf32>, vector<64x64xf32>, vector<16x64xf32> -> vector<16x64xf32>
    %c0_9 = arith.constant 0 : index
    %c0_10 = arith.constant 0 : index
    %10 = vector.load %arg5[%c0_9, %c0_10] : memref<1x64xf32, #tpu.memory_space<vmem>>, vector<1x64xf32>
    %11 = vector.broadcast %10 : vector<1x64xf32> to vector<16x64xf32>
    %12 = arith.addf %9, %11 : vector<16x64xf32>
    %cst_11 = arith.constant 0.000000e+00 : f32
    %13 = vector.broadcast %cst_11 : f32 to vector<16x64xf32>
    %14 = arith.maximumf %12, %13 : vector<16x64xf32>
    %c0_12 = arith.constant 0 : index
    %c0_13 = arith.constant 0 : index
    %15 = vector.load %arg6[%c0_12, %c0_13] : memref<64x1xf32, #tpu.memory_space<vmem>>, vector<64x1xf32>
    %cst_14 = arith.constant dense<0.000000e+00> : vector<16x1xf32>
    %16 = tpu.matmul %14, %15, %cst_14 {dimension_numbers = #tpu.dot_dimension_numbers<[1], [0], [0], [1], [0, 0, 1, 1], [], []>} : vector<16x64xf32>, vector<64x1xf32>, vector<16x1xf32> -> vector<16x1xf32>
    %c0_15 = arith.constant 0 : index
    %c0_16 = arith.constant 0 : index
    %17 = memref.load %arg7[%c0_15, %c0_16] : memref<1x1xf32, #tpu.memory_space<smem>>
    %18 = vector.broadcast %17 : f32 to vector<16x1xf32>
    %19 = arith.addf %16, %18 : vector<16x1xf32>
    %c0_17 = arith.constant 0 : index
    %c0_18 = arith.constant 0 : index
    %20 = vector.load %arg8[%c0_17, %c0_18] : memref<16x1xf32, #tpu.memory_space<vmem>>, vector<16x1xf32>
    tpu.vector_store %arg8[%c0_17, %c0_18], %19 {strides = array<i32>} : memref<16x1xf32, #tpu.memory_space<vmem>>, vector<16x1xf32>,
    return
  }
  func.func @transform_0(%arg0: i32) -> (i32, i32) {
    %c0_i32 = arith.constant 0 : i32
    %c0_i32_0 = arith.constant 0 : i32
    return %arg0, %c0_i32 : i32, i32
  }
  func.func @transform_1(%arg0: i32) -> (i32, i32) {
    %c0_i32 = arith.constant 0 : i32
    %c0_i32_0 = arith.constant 0 : i32
    %c0_i32_1 = arith.constant 0 : i32
    return %c0_i32, %c0_i32_0 : i32, i32
  }
  func.func @transform_2(%arg0: i32) -> (i32, i32) {
    %c0_i32 = arith.constant 0 : i32
    %c0_i32_0 = arith.constant 0 : i32
    %c0_i32_1 = arith.constant 0 : i32
    return %c0_i32, %c0_i32_0 : i32, i32
  }
  func.func @transform_3(%arg0: i32) -> (i32, i32) {
    %c0_i32 = arith.constant 0 : i32
    %c0_i32_0 = arith.constant 0 : i32
    %c0_i32_1 = arith.constant 0 : i32
    return %c0_i32, %c0_i32_0 : i32, i32
  }
  func.func @transform_4(%arg0: i32) -> (i32, i32) {
    %c0_i32 = arith.constant 0 : i32
    %c0_i32_0 = arith.constant 0 : i32
    %c0_i32_1 = arith.constant 0 : i32
    return %c0_i32, %c0_i32_0 : i32, i32
  }
  func.func @transform_5(%arg0: i32) -> (i32, i32) {
    %c0_i32 = arith.constant 0 : i32
    %c0_i32_0 = arith.constant 0 : i32
    %c0_i32_1 = arith.constant 0 : i32
    return %c0_i32, %c0_i32_0 : i32, i32
  }
  func.func @transform_6(%arg0: i32) -> (i32, i32) {
    %c0_i32 = arith.constant 0 : i32
    %c0_i32_0 = arith.constant 0 : i32
    %c0_i32_1 = arith.constant 0 : i32
    return %c0_i32, %c0_i32_0 : i32, i32
  }
  func.func @transform_7(%arg0: i32) -> (i32, i32) {
    %c0_i32 = arith.constant 0 : i32
    %c0_i32_0 = arith.constant 0 : i32
    return %arg0, %c0_i32 : i32, i32
  }
}

</mosaic_0001>

<llo_original>
// kernel: tpu_custom_call.1
$region0: #{tpu_custom_call.1}
  #allocation0 [shape = 'u32[]', space=smem, size = 0x4, offset = 0x4, fixed_abs, tag = 'smem constant byte address 0x4 - core index']
  #allocation1 [shape = 'u32[72,128]{1,0:T(1,128)}', space=vmem, size = 0x9000, scoped, tag = 'internal scratch']
  #allocation2 [shape = 'f32[1,1]{1,0:T(1,128)S(6)}', space=smem, size = 0x200, scoped, tag = 'scoped memory for tpu_custom_call.1']
  %s0 = inlined_call_operand.hbm [shape: f32[32,32], index: 0, kind: input, shape index: {}]
  %s1 = inlined_call_operand.hbm [shape: f32[32,64], index: 1, kind: input, shape index: {}]
  %s2 = inlined_call_operand.vmem [shape: f32[1,64], index: 2, kind: input, shape index: {}]
  %s3 = inlined_call_operand.vmem [shape: f32[64,64], index: 3, kind: input, shape index: {}]
  %s4 = inlined_call_operand.vmem [shape: f32[1,64], index: 4, kind: input, shape index: {}]
  %s5 = inlined_call_operand.vmem [shape: f32[64,1], index: 5, kind: input, shape index: {}]
  %s6 = inlined_call_operand.<no memory space> [shape: f32[1,1], index: 6, kind: input, shape index: {}]
  %s7 = inlined_call_operand.vmem [shape: f32[32,1], index: 7, kind: output, shape index: {}]
  %s8 = sld [smem:[#allocation0]]
  $region69: #{tpu_custom_call.1} parent=0
    _
  %s10 = ssub.s32 1, %s8
  %s11 = scalar_select 0, %s10, %s8
  %12 = sst [smem:[#allocation2]] %s6
  $region1: #{tpu_custom_call.1} parent=0
    #allocation3 [shape = 'u8[16384]{0}', space=vmem, size = 0x4000, scoped, tag = 'input window, operand 0']
    #allocation4 [shape = 's32[2]{0}', space=sflag, size = 0x8, scoped, tag = 'scoped memory for tpu_custom_call.1']
    #allocation5 [shape = 'u8[16384]{0}', space=vmem, size = 0x4000, scoped, tag = 'input window, operand 1, single buffered']
    #allocation6 [shape = 's32[1]{0}', space=sflag, size = 0x4, scoped, tag = 'scoped memory for tpu_custom_call.1']
    %13 = vsyncpa [#allocation4], 0
    %s14 = scalar_lea.sflag [#allocation4], 1
    %15 = vsyncpa %s14, 0
    %16 = vsyncpa [#allocation6], 0
    loop: start=0, step=1, limit=4
    $region2: #{tpu_custom_call.1} parent=1 // loop_pre_header
      _
    $region3: #{tpu_custom_call.1} parent=1 // loop_header
      %s18 = sphi 0, %s22
      %p19 = scmp.ge.s32.totalorder %s18, 4
      %s28 = sphi 0, %s30
      %s31 = sphi 0, %s28
      %s32 = sphi 0, %s31
      %s48 = sphi 0, %s32
      %s52 = sphi 0, %s52
      %s54 = sphi 0, %s52
      %s55 = sphi 0, %s54
      %s69 = sphi 0, %s55
      %s73 = sphi 0, %s73
      %s75 = sphi 0, %s73
      %s76 = sphi 0, %s75
      %s90 = sphi 0, %s76
      %s94 = sphi 0, %s94
      %s96 = sphi 0, %s94
      %s97 = sphi 0, %s96
      %s111 = sphi 0, %s97
      %s115 = sphi 0, %s115
      %s117 = sphi 0, %s115
      %s118 = sphi 0, %s117
      %s132 = sphi 0, %s118
      %s136 = sphi 0, %s136
      %s138 = sphi 0, %s136
      %s139 = sphi 0, %s138
      %s153 = sphi 0, %s139
      %s157 = sphi 0, %s157
      %s159 = sphi 0, %s157
      %s160 = sphi 0, %s159
      %s174 = sphi 0, %s160
      %s180 = sphi 0, %s182
      %s183 = sphi 0, %s180
      %s184 = sphi 0, %s183
      %s200 = sphi 0, %s184
    $region4: #{tpu_custom_call.1} parent=1 // loop_header_branch
      %21 = sbr.rel (%p19) target = $region8
    $region5: #{tpu_custom_call.1} parent=1 // loop_body
      %s23 = ssub.s32 %s18, 1
      %s24 = ssub.s32 %s18, 2
      %s25 = sadd.s32 %s18, 1
      %s26 = ssub.s32 %s18, %s25
      %p27 = scmp.eq.s32.totalorder %s26, 0
      %s29 = sadd.s32 %s28, 1
      %s30 = scalar_select %p27, %s28, %s29
      %p33 = pneg %p27
      %p34 = scmp.eq.s32.totalorder %s18, 1
      %p35 = por %p33, %p34
      %p36 = scmp.ne.s32.totalorder %s28, %s31
      %p37 = scmp.eq.s32.totalorder %s18, 0
      %p38 = por %p36, %p37
      %p39 = scmp.ne.s32.totalorder %s28, %s31
      %p40 = scmp.eq.s32.totalorder %s23, 1
      %p41 = por %p39, %p40
      %p42 = scmp.ne.s32.totalorder %s31, %s32
      %p43 = scmp.eq.s32.totalorder %s23, 0
      %p44 = por %p42, %p43
      %p45 = scmp.ne.s32.totalorder %s31, %s32
      %p46 = scmp.eq.s32.totalorder %s24, 1
      %p47 = por %p45, %p46
      %p49 = scmp.ne.s32.totalorder %s32, %s48
      %p50 = scmp.eq.s32.totalorder %s24, 0
      %p51 = por %p49, %p50
      %s53 = sadd.s32 %s52, 1
      %p56 = scmp.eq.s32.totalorder %s18, 1
      %p57 = scmp.ne.s32.totalorder %s52, %s54
      %p58 = scmp.eq.s32.totalorder %s18, 0
      %p59 = por %p57, %p58
      %p60 = scmp.ne.s32.totalorder %s52, %s54
      %p61 = scmp.eq.s32.totalorder %s23, 1
      %p62 = por %p60, %p61
      %p63 = scmp.ne.s32.totalorder %s54, %s55
      %p64 = scmp.eq.s32.totalorder %s23, 0
      %p65 = por %p63, %p64
      %p66 = scmp.ne.s32.totalorder %s54, %s55
      %p67 = scmp.eq.s32.totalorder %s24, 1
      %p68 = por %p66, %p67
      %p70 = scmp.ne.s32.totalorder %s55, %s69
      %p71 = scmp.eq.s32.totalorder %s24, 0
      %p72 = por %p70, %p71
      %s74 = sadd.s32 %s73, 1
      %p77 = scmp.eq.s32.totalorder %s18, 1
      %p78 = scmp.ne.s32.totalorder %s73, %s75
      %p79 = scmp.eq.s32.totalorder %s18, 0
      %p80 = por %p78, %p79
      %p81 = scmp.ne.s32.totalorder %s73, %s75
      %p82 = scmp.eq.s32.totalorder %s23, 1
      %p83 = por %p81, %p82
      %p84 = scmp.ne.s32.totalorder %s75, %s76
      %p85 = scmp.eq.s32.totalorder %s23, 0
      %p86 = por %p84, %p85
      %p87 = scmp.ne.s32.totalorder %s75, %s76
      %p88 = scmp.eq.s32.totalorder %s24, 1
      %p89 = por %p87, %p88
      %p91 = scmp.ne.s32.totalorder %s76, %s90
      %p92 = scmp.eq.s32.totalorder %s24, 0
      %p93 = por %p91, %p92
      %s95 = sadd.s32 %s94, 1
      %p98 = scmp.eq.s32.totalorder %s18, 1
      %p99 = scmp.ne.s32.totalorder %s94, %s96
      %p100 = scmp.eq.s32.totalorder %s18, 0
      %p101 = por %p99, %p100
      %p102 = scmp.ne.s32.totalorder %s94, %s96
      %p103 = scmp.eq.s32.totalorder %s23, 1
      %p104 = por %p102, %p103
      %p105 = scmp.ne.s32.totalorder %s96, %s97
      %p106 = scmp.eq.s32.totalorder %s23, 0
      %p107 = por %p105, %p106
      %p108 = scmp.ne.s32.totalorder %s96, %s97
      %p109 = scmp.eq.s32.totalorder %s24, 1
      %p110 = por %p108, %p109
      %p112 = scmp.ne.s32.totalorder %s97, %s111
      %p113 = scmp.eq.s32.totalorder %s24, 0
      %p114 = por %p112, %p113
      %s116 = sadd.s32 %s115, 1
      %p119 = scmp.eq.s32.totalorder %s18, 1
      %p120 = scmp.ne.s32.totalorder %s115, %s117
      %p121 = scmp.eq.s32.totalorder %s18, 0
      %p122 = por %p120, %p121
      %p123 = scmp.ne.s32.totalorder %s115, %s117
      %p124 = scmp.eq.s32.totalorder %s23, 1
      %p125 = por %p123, %p124
      %p126 = scmp.ne.s32.totalorder %s117, %s118
      %p127 = scmp.eq.s32.totalorder %s23, 0
      %p128 = por %p126, %p127
      %p129 = scmp.ne.s32.totalorder %s117, %s118
      %p130 = scmp.eq.s32.totalorder %s24, 1
      %p131 = por %p129, %p130
      %p133 = scmp.ne.s32.totalorder %s118, %s132
      %p134 = scmp.eq.s32.totalorder %s24, 0
      %p135 = por %p133, %p134
      %s137 = sadd.s32 %s136, 1
      %p140 = scmp.eq.s32.totalorder %s18, 1
      %p141 = scmp.ne.s32.totalorder %s136, %s138
      %p142 = scmp.eq.s32.totalorder %s18, 0
      %p143 = por %p141, %p142
      %p144 = scmp.ne.s32.totalorder %s136, %s138
      %p145 = scmp.eq.s32.totalorder %s23, 1
      %p146 = por %p144, %p145
      %p147 = scmp.ne.s32.totalorder %s138, %s139
      %p148 = scmp.eq.s32.totalorder %s23, 0
      %p149 = por %p147, %p148
      %p150 = scmp.ne.s32.totalorder %s138, %s139
      %p151 = scmp.eq.s32.totalorder %s24, 1
      %p152 = por %p150, %p151
      %p154 = scmp.ne.s32.totalorder %s139, %s153
      %p155 = scmp.eq.s32.totalorder %s24, 0
      %p156 = por %p154, %p155
      %s158 = sadd.s32 %s157, 1
      %p161 = scmp.eq.s32.totalorder %s18, 1
      %p162 = scmp.ne.s32.totalorder %s157, %s159
      %p163 = scmp.eq.s32.totalorder %s18, 0
      %p164 = por %p162, %p163
      %p165 = scmp.ne.s32.totalorder %s157, %s159
      %p166 = scmp.eq.s32.totalorder %s23, 1
      %p167 = por %p165, %p166
      %p168 = scmp.ne.s32.totalorder %s159, %s160
      %p169 = scmp.eq.s32.totalorder %s23, 0
      %p170 = por %p168, %p169
      %p171 = scmp.ne.s32.totalorder %s159, %s160
      %p172 = scmp.eq.s32.totalorder %s24, 1
      %p173 = por %p171, %p172
      %p175 = scmp.ne.s32.totalorder %s160, %s174
      %p176 = scmp.eq.s32.totalorder %s24, 0
      %p177 = por %p175, %p176
      %s178 = ssub.s32 %s18, %s25
      %p179 = scmp.eq.s32.totalorder %s178, 0
      %s181 = sadd.s32 %s180, 1
      %s182 = scalar_select %p179, %s180, %s181
      %p185 = pneg %p179
      %p186 = scmp.eq.s32.totalorder %s18, 1
      %p187 = por %p185, %p186
      %p188 = scmp.ne.s32.totalorder %s180, %s183
      %p189 = scmp.eq.s32.totalorder %s18, 0
      %p190 = por %p188, %p189
      %p191 = scmp.ne.s32.totalorder %s180, %s183
      %p192 = scmp.eq.s32.totalorder %s23, 1
      %p193 = por %p191, %p192
      %p194 = scmp.ne.s32.totalorder %s183, %s184
      %p195 = scmp.eq.s32.totalorder %s23, 0
      %p196 = por %p194, %p195
      %p197 = scmp.ne.s32.totalorder %s183, %s184
      %p198 = scmp.eq.s32.totalorder %s24, 1
      %p199 = por %p197, %p198
      %p201 = scmp.ne.s32.totalorder %s184, %s200
      %p202 = scmp.eq.s32.totalorder %s24, 0
      %p203 = por %p201, %p202
      %p204 = scmp.le.s32.totalorder 1, %s18
      %p205 = scmp.lt.s32.totalorder %s18, 3
      %p206 = pnand %p204, %p205
      %p207 = pneg %p206
      // Predicated region
      $region9: #{tpu_custom_call.1} parent=5 // pred_check
        _
      $region10: #{tpu_custom_call.1} parent=5 // pred_check_branch
        %209 = sbr.rel (%p206) target = $region12
      $region11: #{tpu_custom_call.1} parent=5 // pred_region
        %s210 = ssub.s32 %s18, 1
        // Predicated region
        $region13: #{tpu_custom_call.1} parent=11 // pred_check
          %p211 = pneg %p65
        $region14: #{tpu_custom_call.1} parent=11 // pred_check_branch
          %213 = sbr.rel (%p211) target = $region16
        $region15: #{tpu_custom_call.1} parent=11 // pred_region
          %215 = vsyncadd [#allocation6], 0
          %s216 = sshll.u32 %s1, 4
          %s217 = int_to_ptr.hbm [resolvable:$true] %s216
          %s218 = sshll.u32 [#allocation5], 4
          %s219 = int_to_ptr.vmem [resolvable:$true] %s218
          %224 = dma.hbm_to_vmem [thread:$0]  %s217, 512, %s219, [#allocation6], 128, 128, 8
        $region16: #{tpu_custom_call.1} parent=11 // pred_fallthru
          _
        // Predicated region
        $region17: #{tpu_custom_call.1} parent=11 // pred_check
          %p225 = pneg %p86
        $region18: #{tpu_custom_call.1} parent=11 // pred_check_branch
          %227 = sbr.rel (%p225) target = $region20
        $region19: #{tpu_custom_call.1} parent=11 // pred_region
          _
        $region20: #{tpu_custom_call.1} parent=11 // pred_fallthru
          _
        // Predicated region
        $region21: #{tpu_custom_call.1} parent=11 // pred_check
          %p228 = pneg %p107
        $region22: #{tpu_custom_call.1} parent=11 // pred_check_branch
          %230 = sbr.rel (%p228) target = $region24
        $region23: #{tpu_custom_call.1} parent=11 // pred_region
          _
        $region24: #{tpu_custom_call.1} parent=11 // pred_fallthru
          _
        // Predicated region
        $region25: #{tpu_custom_call.1} parent=11 // pred_check
          %p231 = pneg %p128
        $region26: #{tpu_custom_call.1} parent=11 // pred_check_branch
          %233 = sbr.rel (%p231) target = $region28
        $region27: #{tpu_custom_call.1} parent=11 // pred_region
          _
        $region28: #{tpu_custom_call.1} parent=11 // pred_fallthru
          _
        // Predicated region
        $region29: #{tpu_custom_call.1} parent=11 // pred_check
          %p234 = pneg %p149
        $region30: #{tpu_custom_call.1} parent=11 // pred_check_branch
          %236 = sbr.rel (%p234) target = $region32
        $region31: #{tpu_custom_call.1} parent=11 // pred_region
          _
        $region32: #{tpu_custom_call.1} parent=11 // pred_fallthru
          _
        // Predicated region
        $region33: #{tpu_custom_call.1} parent=11 // pred_check
          %p237 = pneg %p170
        $region34: #{tpu_custom_call.1} parent=11 // pred_check_branch
          %239 = sbr.rel (%p237) target = $region36
        $region35: #{tpu_custom_call.1} parent=11 // pred_region
          _
        $region36: #{tpu_custom_call.1} parent=11 // pred_fallthru
          _
      $region12: #{tpu_custom_call.1} parent=5 // pred_fallthru
        _
      %p240 = scmp.lt.s32.totalorder %s18, 2
      // Predicated region
      $region37: #{tpu_custom_call.1} parent=5 // pred_check
        %p241 = pneg %p240
      $region38: #{tpu_custom_call.1} parent=5 // pred_check_branch
        %243 = sbr.rel (%p241) target = $region40
      $region39: #{tpu_custom_call.1} parent=5 // pred_region
        // Predicated region
        $region41: #{tpu_custom_call.1} parent=39 // pred_check
          %p244 = pneg %p38
        $region42: #{tpu_custom_call.1} parent=39 // pred_check_branch
          %246 = sbr.rel (%p244) target = $region44
        $region43: #{tpu_custom_call.1} parent=39 // pred_region
          %s247 = sand.u32 %s28, 1
          %s248 = scalar_lea.sflag [#allocation4], %s247
          %s249 = sand.u32 %s28, 1
          %s250 = smul.addr %s249, 16
          %s251 = scalar_lea.vmem [#allocation3], %s250
          %s252 = smul.u32 2, %s18
          %254 = vsyncadd %s248, 0
          %s255 = smul.addr %s252, 8
          %s256 = scalar_lea.hbm %s0, %s255
          %s257 = sshll.u32 %s256, 4
          %s258 = int_to_ptr.hbm [resolvable:$true] %s257
          %s259 = sshll.u32 %s251, 4
          %s260 = int_to_ptr.vmem [resolvable:$true] %s259
          %265 = dma.hbm_to_vmem [thread:$0]  %s258, 256, %s260, %s248, 128, 128, 8
        $region44: #{tpu_custom_call.1} parent=39 // pred_fallthru
          _
      $region40: #{tpu_custom_call.1} parent=5 // pred_fallthru
        _
      %p266 = scmp.le.s32.totalorder 1, %s18
      %p267 = scmp.lt.s32.totalorder %s18, 3
      %p268 = pnand %p266, %p267
      %p269 = pneg %p268
      // Predicated region
      $region45: #{tpu_custom_call.1} parent=5 // pred_check
        _
      $region46: #{tpu_custom_call.1} parent=5 // pred_check_branch
        %271 = sbr.rel (%p268) target = $region48
      $region47: #{tpu_custom_call.1} parent=5 // pred_region
        %s272 = ssub.s32 %s18, 1
        %s273 = sand.u32 %s31, 1
        %s274 = scalar_lea.sflag [#allocation4], %s273
        %s275 = sand.u32 %s31, 1
        %s276 = smul.addr %s275, 16
        %s277 = scalar_lea.vmem [#allocation3], %s276
        // Predicated region
        $region49: #{tpu_custom_call.1} parent=47 // pred_check
          %p278 = pneg %p44
        $region50: #{tpu_custom_call.1} parent=47 // pred_check_branch
          %280 = sbr.rel (%p278) target = $region52
        $region51: #{tpu_custom_call.1} parent=47 // pred_region
          %282 = dma.done %s274, 256
        $region52: #{tpu_custom_call.1} parent=47 // pred_fallthru
          _
        // Predicated region
        $region53: #{tpu_custom_call.1} parent=47 // pred_check
          %p283 = pneg %p65
        $region54: #{tpu_custom_call.1} parent=47 // pred_check_branch
          %285 = sbr.rel (%p283) target = $region56
        $region55: #{tpu_custom_call.1} parent=47 // pred_region
          %287 = dma.done [#allocation6], 512
        $region56: #{tpu_custom_call.1} parent=47 // pred_fallthru
          _
        %s288 = sand.u32 %s31, 1
        %s289 = scalar_lea.sflag [#allocation4], %s288
        %s290 = sand.u32 %s31, 1
        %s291 = smul.addr %s290, 16
        %s292 = scalar_lea.vmem [#allocation3], %s291
        %p293 = pneg %p44
        %p294 = pneg %p41
        %p295 = pneg %p65
        %p296 = pneg %p62
        %p297 = pneg %p86
        %p298 = pneg %p83
        %p299 = pneg %p107
        %p300 = pneg %p104
        %p301 = pneg %p128
        %p302 = pneg %p125
        %p303 = pneg %p149
        %p304 = pneg %p146
        %p305 = pneg %p170
        %p306 = pneg %p167
        %p307 = pneg %p196
        %p308 = pneg %p193
        %s309 = smul.u32 2, %s23
        %p310 = scmp.lt.s32.totalorder %s309, 3
        %s311 = scalar_select %p310, %s309, 3
        %s312 = smul.addr %s311, 8
        %s313 = scalar_lea.vmem %s7, %s312
        %s314 = smul.u32 2, %s23
        %s315 = smul.u32 2, %s23
        %p316 = scmp.lt.s32.totalorder %s315, 3
        %s317 = scalar_select %p316, %s315, 3
        %s318 = smul.addr %s317, 8
        %s319 = scalar_lea.vmem %s7, %s318
        %s320 = smul.u32 2, %s23
        %v321 = vld [vmem:[%s277] sm:$0xff]
        %v322 = vld [vmem:[%s277 + $0x8] sm:$0xff]
        %v323 = vld [vmem:[#allocation5] sm:$0xff]
        %v324 = vld [vmem:[#allocation5 + $0x8] sm:$0xff]
        %v325 = vld [vmem:[#allocation5 + $0x10] sm:$0xff]
        %v326 = vld [vmem:[#allocation5 + $0x18] sm:$0xff]
        %v327 = vld [vmem:[%s2] sm:$0x1]
        %v329 = vperm.slane %v327, 0
        %vm331 = vcmask 261120
        %v333 = vsel %vm331, %v321, 0
        %v336 = vsel %vm331, %v322, 0
        %338 = vmatpush.msra.mxu0 0.0
        %339 = vmatpush.msra.mxu0 0.0
        %340 = vmatpush.msra.mxu0 0.0
        %341 = vmatpush.msra.mxu0 0.0
        %342 = vmatpush.msra.mxu0 0.0
        %343 = vmatpush.msra.mxu0 0.0
        %344 = vmatpush.msra.mxu0 0.0
        %345 = vmatpush.msra.mxu0 0.0
        %346 = vmatpush.msra.mxu0 0.0
        %347 = vmatpush.msra.mxu0 0.0
        %348 = vmatpush.msra.mxu0 0.0
        %349 = vmatpush.msra.mxu0 0.0
        %350 = vmatpush.msra.mxu0 %v326
        %351 = vmatpush.msra.mxu0 %v325
        %352 = vmatpush.msra.mxu0 %v324
        %353 = vmatpush.msra.mxu0 %v323
        %354 = vmatmul.f32.gmra.mxu0 %v333
        %v355 = vpop.f32.mrf.mxu0
        %v356 = vadd.f32 %v329, %v355
        %357 = vmatmul.f32.gmra.mxu0 %v336
        %v358 = vpop.f32.mrf.mxu0
        %v359 = vadd.f32 %v329, %v358
        %360 = vdwg.mxu0
        %v361 = vmax.f32 %v356, 0.0
        %v362 = vmax.f32 %v359, 0.0
        %v363 = vld [vmem:[%s3] sm:$0xff]
        %v364 = vld [vmem:[%s3 + $0x8] sm:$0xff]
        %v365 = vld [vmem:[%s3 + $0x10] sm:$0xff]
        %v366 = vld [vmem:[%s3 + $0x18] sm:$0xff]
        %v367 = vld [vmem:[%s3 + $0x20] sm:$0xff]
        %v368 = vld [vmem:[%s3 + $0x28] sm:$0xff]
        %v369 = vld [vmem:[%s3 + $0x30] sm:$0xff]
        %v370 = vld [vmem:[%s3 + $0x38] sm:$0xff]
        %v371 = vld [vmem:[%s4] sm:$0x1]
        %v373 = vperm.slane %v371, 0
        %vm375 = vcmask 523264
        %v377 = vsel %vm375, %v361, 0
        %v380 = vsel %vm375, %v362, 0
        %382 = vmatpush.msra.mxu0 0.0
        %383 = vmatpush.msra.mxu0 0.0
        %384 = vmatpush.msra.mxu0 0.0
        %385 = vmatpush.msra.mxu0 0.0
        %386 = vmatpush.msra.mxu0 0.0
        %387 = vmatpush.msra.mxu0 0.0
        %388 = vmatpush.msra.mxu0 0.0
        %389 = vmatpush.msra.mxu0 0.0
        %390 = vmatpush.msra.mxu0 %v370
        %391 = vmatpush.msra.mxu0 %v369
        %392 = vmatpush.msra.mxu0 %v368
        %393 = vmatpush.msra.mxu0 %v367
        %394 = vmatpush.msra.mxu0 %v366
        %395 = vmatpush.msra.mxu0 %v365
        %396 = vmatpush.msra.mxu0 %v364
        %397 = vmatpush.msra.mxu0 %v363
        %398 = vmatmul.f32.gmra.mxu0 %v377
        %v399 = vpop.f32.mrf.mxu0
        %v400 = vadd.f32 %v373, %v399
        %401 = vmatmul.f32.gmra.mxu0 %v380
        %v402 = vpop.f32.mrf.mxu0
        %v403 = vadd.f32 %v373, %v402
        %404 = vdwg.mxu0
        %v405 = vmax.f32 %v400, 0.0
        %v406 = vmax.f32 %v403, 0.0
        %v407 = vld [vmem:[%s5] sm:$0xff]
        %v408 = vld [vmem:[%s5 + $0x8] sm:$0xff]
        %v409 = vld [vmem:[%s5 + $0x10] sm:$0xff]
        %v410 = vld [vmem:[%s5 + $0x18] sm:$0xff]
        %v411 = vld [vmem:[%s5 + $0x20] sm:$0xff]
        %v412 = vld [vmem:[%s5 + $0x28] sm:$0xff]
        %v413 = vld [vmem:[%s5 + $0x30] sm:$0xff]
        %v414 = vld [vmem:[%s5 + $0x38] sm:$0xff]
        %s415 = sld [smem:[#allocation2]]
        %v416 = vstv %s415
        %v418 = vsel %vm375, %v405, 0
        %v421 = vsel %vm375, %v406, 0
        %423 = vmatpush.msra.mxu0 0.0
        %424 = vmatpush.msra.mxu0 0.0
        %425 = vmatpush.msra.mxu0 0.0
        %426 = vmatpush.msra.mxu0 0.0
        %427 = vmatpush.msra.mxu0 0.0
        %428 = vmatpush.msra.mxu0 0.0
        %429 = vmatpush.msra.mxu0 0.0
        %430 = vmatpush.msra.mxu0 0.0
        %431 = vmatpush.msra.mxu0 %v414
        %432 = vmatpush.msra.mxu0 %v413
        %433 = vmatpush.msra.mxu0 %v412
        %434 = vmatpush.msra.mxu0 %v411
        %435 = vmatpush.msra.mxu0 %v410
        %436 = vmatpush.msra.mxu0 %v409
        %437 = vmatpush.msra.mxu0 %v408
        %438 = vmatpush.msra.mxu0 %v407
        %439 = vmatmul.f32.gmra.mxu0 %v418
        %v440 = vpop.f32.mrf.mxu0
        %v441 = vadd.f32 %v416, %v440
        %442 = vmatmul.f32.gmra.mxu0 %v421
        %v443 = vpop.f32.mrf.mxu0
        %v444 = vadd.f32 %v416, %v443
        %445 = vdwg.mxu0
        %vm446 = vcmask 7168
        %447 = vst.msk [vmem:[%s319] sm:$0xff] %vm446, %v441
        %448 = vst.msk [vmem:[%s319 + $0x8] sm:$0xff] %vm446, %v444
        %s449 = smul.u32 2, %s23
        %p450 = scmp.lt.s32.totalorder %s449, 3
        %s451 = scalar_select %p450, %s449, 3
        %s452 = smul.addr %s451, 8
        %s453 = scalar_lea.vmem %s7, %s452
        // Predicated region
        $region57: #{tpu_custom_call.1} parent=47 // pred_check
          %p454 = pneg %p193
        $region58: #{tpu_custom_call.1} parent=47 // pred_check_branch
          %456 = sbr.rel (%p454) target = $region60
        $region59: #{tpu_custom_call.1} parent=47 // pred_region
          %s457 = smul.u32 2, %s23
        $region60: #{tpu_custom_call.1} parent=47 // pred_fallthru
          _
      $region48: #{tpu_custom_call.1} parent=5 // pred_fallthru
        _
      %p458 = scmp.le.s32.totalorder 2, %s18
      // Predicated region
      $region61: #{tpu_custom_call.1} parent=5 // pred_check
        %p459 = pneg %p458
      $region62: #{tpu_custom_call.1} parent=5 // pred_check_branch
        %461 = sbr.rel (%p459) target = $region64
      $region63: #{tpu_custom_call.1} parent=5 // pred_region
        %s462 = ssub.s32 %s18, 2
        // Predicated region
        $region65: #{tpu_custom_call.1} parent=63 // pred_check
          %p463 = pneg %p199
        $region66: #{tpu_custom_call.1} parent=63 // pred_check_branch
          %465 = sbr.rel (%p463) target = $region68
        $region67: #{tpu_custom_call.1} parent=63 // pred_region
          %s466 = smul.u32 2, %s24
          %p467 = scmp.lt.s32.totalorder %s466, 3
          %s468 = scalar_select %p467, %s466, 3
          %s469 = smul.addr %s468, 8
          %s470 = scalar_lea.vmem %s7, %s469
        $region68: #{tpu_custom_call.1} parent=63 // pred_fallthru
          _
      $region64: #{tpu_custom_call.1} parent=5 // pred_fallthru
        _
    $region6: #{tpu_custom_call.1} parent=1 // loop_footer
      %s22 = sadd.s32 1, %s18
    $region7: #{tpu_custom_call.1} parent=1 // loop_footer_branch
      %17 = sbr.rel target = $region3
    $region8: #{tpu_custom_call.1} parent=1 // loop_exit
      _
    %471 = vsyncpa [#allocation4], 1
    %s472 = scalar_lea.sflag [#allocation4], 1
    %473 = vsyncpa %s472, 1
    %474 = vsyncpa [#allocation6], 1

</llo_original>
